<compile_context>
chip_gen: v7x
topology: tpu7x:2x2x1
jax: 0.10.0
libtpu: 0.0.40
codegen_flags: <defaults>
</compile_context>

<pallas_src>
import functools
import math

import jax
import jax.numpy as jnp
from jax.experimental import pallas as pl
from jax.experimental.pallas import tpu as pltpu


_VMEM_LIMIT = 48 * 1024 * 1024          # scoped VMEM limit for every pass
_TILE_TARGET_BYTES = 4 * 1024 * 1024    # per-block target for tiled passes
_FUSE_BYTES = 8 * 1024 * 1024           # per-batch slab budget for full fusion


def _round_width(width, multiplier, min_width=8, divisor=8):
    """Same rounding rule as the PyTorch module."""
    if not multiplier:
        return width
    width *= multiplier
    min_width = min_width or divisor
    width_out = max(min_width, int(width + divisor / 2) // divisor * divisor)
    if width_out < 0.9 * width:
        width_out += divisor
    return int(width_out)


# --------------------------- tiling heuristics --------------------------------
def _choose_n_block(N, bytes_per_n, fuse_bytes):
    """Largest divisor of N whose fused block fits the budget, while keeping at
    least 2 grid steps (so v7x's two TensorCores both get work)."""
    max_bn = max(1, fuse_bytes // max(bytes_per_n, 1))
    if N >= 2:
        max_bn = min(max_bn, N // 2)
    best = 1
    for bn in range(1, min(N, max_bn) + 1):
        if N % bn == 0:
            best = bn
    return best


def _choose_s_tile(S, C, target_bytes):
    """S is a multiple of 128 here; pick a lane-dense tile that divides S and
    keeps the block around `target_bytes`."""
    target_elems = max(128, target_bytes // (C * 4))
    best, t = 128, 128
    limit = min(target_elems, S)
    while t <= limit:
        if S % t == 0:
            best = t
        t += 128
    # If one tile would cover all of S, split in two so the scale pass keeps a
    # parallel S axis for v7x's two TensorCores (harmless on v5e/v6e).
    if best == S and S >= 256 and (S // 2) % 128 == 0:
        best = S // 2
    return best


def _choose_c_tile(C, S, target_bytes):
    """Pick a channel tile (multiple of 8, divides C) bounding (tC, S) blocks."""
    if C % 8 != 0:
        return C
    target_elems = max(8 * S, target_bytes // 4)
    divisors = [d for d in range(8, C + 1, 8) if C % d == 0]
    fitting = [d for d in divisors if d * S <= target_elems]
    return max(fitting) if fitting else C


# ------------------------------- kernels --------------------------------------
def _fused_kernel(x_ref, w1_ref, b1_ref, w2t_ref, b2c_ref, o_ref, *,
                  inv_s, relu_act):
    # x_ref/o_ref: (bn, C, S); w1: (C, F); b1: (1, F); w2t: (C, F); b2c: (C, 1).
    x = x_ref[...].astype(jnp.float32)
    pooled = jnp.sum(x, axis=-1, keepdims=True) * inv_s              # (bn, C, 1)
    # Excitation MLP with pure VPU broadcast + XLU reduce (no tiny matmuls).
    h = jnp.sum(pooled * w1_ref[...], axis=1, keepdims=True) + b1_ref[...]  # (bn,1,F)
    h = jnp.maximum(h, 0.0) if relu_act else h * jax.nn.sigmoid(h)
    g = jax.nn.sigmoid(
        jnp.sum(h * w2t_ref[...], axis=-1, keepdims=True) + b2c_ref[...])   # (bn,C,1)
    o_ref[...] = (x * g).astype(o_ref.dtype)


def _pool_accum_kernel(x_ref, sum_ref):
    # x_ref: (1, C, tS); sum_ref: (1, 1, C, 1) resident across the s axis.
    @pl.when(pl.program_id(2) == 0)
    def _():
        sum_ref[...] = jnp.zeros_like(sum_ref)

    sum_ref[...] += jnp.sum(
        x_ref[...].astype(jnp.float32), axis=-1, keepdims=True)[None]


def _pool_full_kernel(x_ref, sum_ref):
    # x_ref: (1, tC, S) — whole S resident, single reduce per block.
    sum_ref[...] = jnp.sum(x_ref[...].astype(jnp.float32), axis=-1, keepdims=True)


def _scale_kernel(x_ref, g_ref, o_ref):
    # x_ref/o_ref: (1, C_blk, tS); g_ref: (1, C_blk, 1) broadcast over lanes.
    o_ref[...] = (x_ref[...] * g_ref[...]).astype(o_ref.dtype)


# ------------------------------- wrapper ---------------------------------------
def _excite_jax(pooled, w1, b1, w2, b2, relu_act):
    """Tiny excitation MLP for the non-fused paths (negligible vs streaming)."""
    h = pooled @ w1 + b1.reshape(1, -1)
    h = jnp.maximum(h, 0.0) if relu_act else h * jax.nn.sigmoid(h)
    g = jax.nn.sigmoid(h @ w2 + b2.reshape(1, -1))
    return g[:, :, None].astype(jnp.float32)          # (N, C, 1)


def se_forward(x_ncthw, w1, b1, w2, b2, *, relu_act=True,
               fuse_bytes=_FUSE_BYTES, donate_input=False):
    """SE forward.

    Args:
      x_ncthw: (N, C, T, H, W) float32 (PyTorch NCTHW layout).
      w1: (C, F)  fc1 Conv3d weight, squeezed & transposed.   b1: (F,) or (1, F).
      w2: (F, C)  fc2 Conv3d weight, squeezed & transposed.   b2: (C,) or (1, C).
      relu_act: ReLU (True, module default) or Swish (False) after fc1.
      donate_input: write the result in place of x (caller must not reuse x).
    Returns:
      (N, C, T, H, W), same semantics as the PyTorch module: x_in * gate.
    """
    N, C, T, H, W = x_ncthw.shape
    F = w1.shape[1]
    S = T * H * W
    x = x_ncthw.reshape(N, C, S)                      # pure view, no HBM traffic
    dt = x.dtype
    inv_s = 1.0 / S

    w1f = w1.astype(jnp.float32)                      # (C, F)
    b1r = b1.reshape(1, F).astype(jnp.float32)        # (1, F)
    w2t = w2.astype(jnp.float32).T                    # (C, F)  (for in-kernel use)
    b2c = b2.reshape(C, 1).astype(jnp.float32)        # (C, 1)

    io_alias = {0: 0} if donate_input else {}
    itemsize = 4

    # ------------------ Path A: fully fused (read once / write once) -----------
    if C * S * itemsize <= fuse_bytes and C * F * itemsize <= fuse_bytes:
        bn = _choose_n_block(N, C * S * itemsize, fuse_bytes)
        kernel = functools.partial(_fused_kernel, inv_s=inv_s, relu_act=relu_act)
        out = pl.pallas_call(
            kernel,
            out_shape=jax.ShapeDtypeStruct((N, C, S), dt),
            grid_spec=pltpu.PrefetchScalarGridSpec(
                num_scalar_prefetch=0,
                grid=(N // bn,),
                in_specs=[
                    pl.BlockSpec((bn, C, S), lambda i: (i, 0, 0)),
                    pl.BlockSpec((C, F), lambda i: (0, 0)),
                    pl.BlockSpec((1, F), lambda i: (0, 0)),
                    pl.BlockSpec((C, F), lambda i: (0, 0)),
                    pl.BlockSpec((C, 1), lambda i: (0, 0)),
                ],
                out_specs=pl.BlockSpec((bn, C, S), lambda i: (i, 0, 0)),
            ),
            compiler_params=pltpu.CompilerParams(
                dimension_semantics=("parallel",),
                vmem_limit_bytes=_VMEM_LIMIT),
            input_output_aliases=io_alias,
        )(x, w1f, b1r, w2t, b2c)
        return out.reshape(N, C, T, H, W)

    # ------------------ Path B: two passes, lane-dense S tiling ----------------
    if S % 128 == 0:
        tS = _choose_s_tile(S, C, _TILE_TARGET_BYTES)
        n_s = S // tS
        P = 2 if (n_s % 2 == 0 and n_s >= 2) else 1   # parallel S split (v7x)
        n_s_inner = n_s // P

        pooled_sum = pl.pallas_call(
            _pool_accum_kernel,
            out_shape=jax.ShapeDtypeStruct((N, P, C, 1), jnp.float32),
            grid_spec=pltpu.PrefetchScalarGridSpec(
                num_scalar_prefetch=0,
                grid=(N, P, n_s_inner),
                in_specs=[pl.BlockSpec(
                    (1, C, tS),
                    lambda n, p, s: (n, 0, p * n_s_inner + s))],
                out_specs=pl.BlockSpec((1, 1, C, 1),
                                       lambda n, p, s: (n, p, 0, 0)),
            ),
            compiler_params=pltpu.CompilerParams(
                dimension_semantics=("parallel", "parallel", "arbitrary"),
                vmem_limit_bytes=_VMEM_LIMIT),
        )(x)

        pooled = jnp.sum(pooled_sum, axis=1)[:, :, 0] * inv_s      # (N, C)
        gate = _excite_jax(pooled, w1f, b1r, w2, b2, relu_act)     # (N, C, 1)

        out = pl.pallas_call(
            _scale_kernel,
            out_shape=jax.ShapeDtypeStruct((N, C, S), dt),
            grid_spec=pltpu.PrefetchScalarGridSpec(
                num_scalar_prefetch=0,
                grid=(N, n_s),
                in_specs=[
                    pl.BlockSpec((1, C, tS), lambda n, s: (n, 0, s)),
                    pl.BlockSpec((1, C, 1), lambda n, s: (n, 0, 0)),
                ],
                out_specs=pl.BlockSpec((1, C, tS), lambda n, s: (n, 0, s)),
            ),
            compiler_params=pltpu.CompilerParams(
                dimension_semantics=("parallel", "parallel"),
                vmem_limit_bytes=_VMEM_LIMIT),
            input_output_aliases=io_alias,
        )(x, gate)
        return out.reshape(N, C, T, H, W)

    # --------- Path C: S not a multiple of 128 and too big to fuse -------------
    # Tile along C instead (full-S blocks but bounded channel slices).
    tC = _choose_c_tile(C, S, _TILE_TARGET_BYTES)
    n_c = C // tC

    pooled_sum = pl.pallas_call(
        _pool_full_kernel,
        out_shape=jax.ShapeDtypeStruct((N, C, 1), jnp.float32),
        grid_spec=pltpu.PrefetchScalarGridSpec(
            num_scalar_prefetch=0,
            grid=(N, n_c),
            in_specs=[pl.BlockSpec((1, tC, S), lambda n, c: (n, c, 0))],
            out_specs=pl.BlockSpec((1, tC, 1), lambda n, c: (n, c, 0)),
        ),
        compiler_params=pltpu.CompilerParams(
            dimension_semantics=("parallel", "parallel"),
            vmem_limit_bytes=_VMEM_LIMIT),
    )(x)

    pooled = pooled_sum[:, :, 0] * inv_s
    gate = _excite_jax(pooled, w1f, b1r, w2, b2, relu_act)

    out = pl.pallas_call(
        _scale_kernel,
        out_shape=jax.ShapeDtypeStruct((N, C, S), dt),
        grid_spec=pltpu.PrefetchScalarGridSpec(
            num_scalar_prefetch=0,
            grid=(N, n_c),
            in_specs=[
                pl.BlockSpec((1, tC, S), lambda n, c: (n, c, 0)),
                pl.BlockSpec((1, tC, 1), lambda n, c: (n, c, 0)),
            ],
            out_specs=pl.BlockSpec((1, tC, S), lambda n, c: (n, c, 0)),
        ),
        compiler_params=pltpu.CompilerParams(
            dimension_semantics=("parallel", "parallel"),
            vmem_limit_bytes=_VMEM_LIMIT),
        input_output_aliases=io_alias,
    )(x, gate)
    return out.reshape(N, C, T, H, W)


def se_reference(x, w1, b1, w2, b2, relu_act=True):
    """Pure-JAX reference mirroring the PyTorch forward."""
    pooled = jnp.mean(x, axis=(2, 3, 4))
    h = pooled @ w1 + b1.reshape(1, -1)
    h = jnp.maximum(h, 0.0) if relu_act else h * jax.nn.sigmoid(h)
    g = jax.nn.sigmoid(h @ w2 + b2.reshape(1, -1))
    return x * g[:, :, None, None, None]


if __name__ == "__main__":
    dim_in = 16
    ratio = 0.25
    dim_fc = _round_width(dim_in, ratio)     # -> 8

    key = jax.random.PRNGKey(0)
    kx, kx2, kw1, kb1, kw2, kb2 = jax.random.split(key, 6)

    # 1x1x1 Conv3d weights stored squeezed: fc1 (C, F), fc2 (F, C).
    w1 = jax.random.normal(kw1, (dim_in, dim_fc), jnp.float32) / math.sqrt(dim_in)
    b1 = jax.random.normal(kb1, (dim_fc,), jnp.float32) * 0.1
    w2 = jax.random.normal(kw2, (dim_fc, dim_in), jnp.float32) / math.sqrt(dim_fc)
    b2 = jax.random.normal(kb2, (dim_in,), jnp.float32) * 0.1

    # Path A (fused single kernel): S = 4*16*16 = 1024.
    x = jax.random.normal(kx, (2, dim_in, 4, 16, 16), dtype=jnp.float32)
    y = jax.block_until_ready(jax.jit(se_forward)(x, w1, b1, w2, b2))
    assert y.shape == x.shape
    assert jnp.allclose(y, se_reference(x, w1, b1, w2, b2), atol=1e-5, rtol=1e-5)

    # Path B (two-pass, S-tiled) — forced by disabling fusion.
    fwd_nofuse = jax.jit(functools.partial(se_forward, fuse_bytes=0))
    y_b = jax.block_until_ready(fwd_nofuse(x, w1, b1, w2, b2))
    assert jnp.allclose(y_b, se_reference(x, w1, b1, w2, b2), atol=1e-5, rtol=1e-5)

    # Path C (C-tiled, S not a multiple of 128) — forced by disabling fusion.
    x2 = jax.random.normal(kx2, (2, dim_in, 3, 5, 7), dtype=jnp.float32)  # S=105
    y_c = jax.block_until_ready(fwd_nofuse(x2, w1, b1, w2, b2))
    assert jnp.allclose(y_c, se_reference(x2, w1, b1, w2, b2), atol=1e-5, rtol=1e-5)

    # Swish activation variant (relu_act=False in the module).
    fwd_swish = jax.jit(functools.partial(se_forward, relu_act=False))
    y_s = jax.block_until_ready(fwd_swish(x, w1, b1, w2, b2))
    assert jnp.allclose(y_s, se_reference(x, w1, b1, w2, b2, relu_act=False),
                        atol=1e-5, rtol=1e-5)

    print("KERNEL_OK")
</pallas_src>

<mosaic_0001>
module attributes {stable_mosaic.version = 11 : i64} {
  func.func @_fused_kernel(%arg0: i32, %arg1: memref<1x16x1024xf32, #tpu.memory_space<vmem>>, %arg2: memref<16x8xf32, #tpu.memory_space<vmem>>, %arg3: memref<1x8xf32, #tpu.memory_space<vmem>>, %arg4: memref<16x8xf32, #tpu.memory_space<vmem>>, %arg5: memref<16x1xf32, #tpu.memory_space<vmem>>, %arg6: memref<1x16x1024xf32, #tpu.memory_space<vmem>>) attributes {dimension_semantics = [#tpu.dimension_semantics<parallel>], iteration_bounds = array<i64: 2>, scalar_prefetch = 0 : i64, scratch_operands = 0 : i64, tpu.core_type = #tpu.core_type<tc>, window_params = [{transform_indices = @transform_0, window_bounds = array<i64: 1, 16, 1024>}, {pipeline_mode = #tpu.pipeline_mode<synchronous>, transform_indices = @transform_1, window_bounds = array<i64: 16, 8>}, {pipeline_mode = #tpu.pipeline_mode<synchronous>, transform_indices = @transform_2, window_bounds = array<i64: 1, 8>}, {pipeline_mode = #tpu.pipeline_mode<synchronous>, transform_indices = @transform_3, window_bounds = array<i64: 16, 8>}, {pipeline_mode = #tpu.pipeline_mode<synchronous>, transform_indices = @transform_4, window_bounds = array<i64: 16, 1>}, {transform_indices = @transform_5, window_bounds = array<i64: 1, 16, 1024>}]} {
    %c0 = arith.constant 0 : index
    %c0_0 = arith.constant 0 : index
    %c0_1 = arith.constant 0 : index
    %0 = vector.load %arg1[%c0, %c0_0, %c0_1] : memref<1x16x1024xf32, #tpu.memory_space<vmem>>, vector<1x16x1024xf32>
    %cst = arith.constant dense<0.000000e+00> : vector<1x16xf32>
    %1 = vector.multi_reduction <add>, %0, %cst [2] : vector<1x16x1024xf32> to vector<1x16xf32>
    %2 = vector.shape_cast %1 : vector<1x16xf32> to vector<1x16x1xf32>
    %cst_2 = arith.constant 9.765625E-4 : f32
    %3 = vector.broadcast %cst_2 : f32 to vector<1x16x1xf32>
    %4 = arith.mulf %2, %3 : vector<1x16x1xf32>
    %c0_3 = arith.constant 0 : index
    %c0_4 = arith.constant 0 : index
    %5 = vector.load %arg2[%c0_3, %c0_4] : memref<16x8xf32, #tpu.memory_space<vmem>>, vector<16x8xf32>
    %6 = vector.shape_cast %5 : vector<16x8xf32> to vector<1x16x8xf32>
    %7 = vector.broadcast %4 : vector<1x16x1xf32> to vector<1x16x8xf32>
    %8 = arith.mulf %7, %6 : vector<1x16x8xf32>
    %cst_5 = arith.constant dense<0.000000e+00> : vector<1x8xf32>
    %9 = vector.multi_reduction <add>, %8, %cst_5 [1] : vector<1x16x8xf32> to vector<1x8xf32>
    %10 = vector.shape_cast %9 : vector<1x8xf32> to vector<1x1x8xf32>
    %c0_6 = arith.constant 0 : index
    %c0_7 = arith.constant 0 : index
    %11 = vector.load %arg3[%c0_6, %c0_7] : memref<1x8xf32, #tpu.memory_space<vmem>>, vector<1x8xf32>
    %12 = vector.shape_cast %11 : vector<1x8xf32> to vector<1x1x8xf32>
    %13 = arith.addf %10, %12 : vector<1x1x8xf32>
    %cst_8 = arith.constant 0.000000e+00 : f32
    %14 = vector.broadcast %cst_8 : f32 to vector<1x1x8xf32>
    %15 = arith.maximumf %13, %14 : vector<1x1x8xf32>
    %c0_9 = arith.constant 0 : index
    %c0_10 = arith.constant 0 : index
    %16 = vector.load %arg4[%c0_9, %c0_10] : memref<16x8xf32, #tpu.memory_space<vmem>>, vector<16x8xf32>
    %17 = vector.shape_cast %16 : vector<16x8xf32> to vector<1x16x8xf32>
    %18 = vector.broadcast %15 : vector<1x1x8xf32> to vector<1x16x8xf32>
    %19 = arith.mulf %18, %17 : vector<1x16x8xf32>
    %cst_11 = arith.constant dense<0.000000e+00> : vector<1x16xf32>
    %20 = vector.multi_reduction <add>, %19, %cst_11 [2] : vector<1x16x8xf32> to vector<1x16xf32>
    %21 = vector.shape_cast %20 : vector<1x16xf32> to vector<1x16x1xf32>
    %c0_12 = arith.constant 0 : index
    %c0_13 = arith.constant 0 : index
    %22 = vector.load %arg5[%c0_12, %c0_13] : memref<16x1xf32, #tpu.memory_space<vmem>>, vector<16x1xf32>
    %23 = vector.shape_cast %22 : vector<16x1xf32> to vector<1x16x1xf32>
    %24 = arith.addf %21, %23 : vector<1x16x1xf32>
    %25 = arith.negf %24 : vector<1x16x1xf32>
    %26 = math.exp %25 : vector<1x16x1xf32>
    %cst_14 = arith.constant 1.000000e+00 : f32
    %27 = vector.broadcast %cst_14 : f32 to vector<1x16x1xf32>
    %28 = arith.addf %27, %26 : vector<1x16x1xf32>
    %29 = arith.divf %27, %28 : vector<1x16x1xf32>
    %30 = vector.broadcast %29 : vector<1x16x1xf32> to vector<1x16x1024xf32>
    %31 = arith.mulf %0, %30 : vector<1x16x1024xf32>
    %c0_15 = arith.constant 0 : index
    %c0_16 = arith.constant 0 : index
    %c0_17 = arith.constant 0 : index
    %32 = vector.load %arg6[%c0_15, %c0_16, %c0_17] : memref<1x16x1024xf32, #tpu.memory_space<vmem>>, vector<1x16x1024xf32>
    tpu.vector_store %arg6[%c0_15, %c0_16, %c0_17], %31 {strides = array<i32>} : memref<1x16x1024xf32, #tpu.memory_space<vmem>>, vector<1x16x1024xf32>,
    return
  }
  func.func @transform_0(%arg0: i32) -> (i32, i32, i32) {
    %c0_i32 = arith.constant 0 : i32
    %c0_i32_0 = arith.constant 0 : i32
    %c0_i32_1 = arith.constant 0 : i32
    return %arg0, %c0_i32, %c0_i32_0 : i32, i32, i32
  }
  func.func @transform_1(%arg0: i32) -> (i32, i32) {
    %c0_i32 = arith.constant 0 : i32
    %c0_i32_0 = arith.constant 0 : i32
    %c0_i32_1 = arith.constant 0 : i32
    return %c0_i32, %c0_i32_0 : i32, i32
  }
  func.func @transform_2(%arg0: i32) -> (i32, i32) {
    %c0_i32 = arith.constant 0 : i32
    %c0_i32_0 = arith.constant 0 : i32
    %c0_i32_1 = arith.constant 0 : i32
    return %c0_i32, %c0_i32_0 : i32, i32
  }
  func.func @transform_3(%arg0: i32) -> (i32, i32) {
    %c0_i32 = arith.constant 0 : i32
    %c0_i32_0 = arith.constant 0 : i32
    %c0_i32_1 = arith.constant 0 : i32
    return %c0_i32, %c0_i32_0 : i32, i32
  }
  func.func @transform_4(%arg0: i32) -> (i32, i32) {
    %c0_i32 = arith.constant 0 : i32
    %c0_i32_0 = arith.constant 0 : i32
    %c0_i32_1 = arith.constant 0 : i32
    return %c0_i32, %c0_i32_0 : i32, i32
  }
  func.func @transform_5(%arg0: i32) -> (i32, i32, i32) {
    %c0_i32 = arith.constant 0 : i32
    %c0_i32_0 = arith.constant 0 : i32
    %c0_i32_1 = arith.constant 0 : i32
    return %arg0, %c0_i32, %c0_i32_0 : i32, i32, i32
  }
}

</mosaic_0001>

<llo_original>
// kernel: se_forward.1
$region0: #{se_forward.1}
  #allocation0 [shape = 'u32[]', space=smem, size = 0x4, offset = 0x4, fixed_abs, tag = 'smem constant byte address 0x4 - core index']
  #allocation1 [shape = 'u32[144,128]{1,0:T(1,128)}', space=vmem, size = 0x12000, scoped, tag = 'internal scratch']
  %s0 = inlined_call_operand.vmem [shape: f32[2,16,1024], index: 0, kind: input, shape index: {}]
  %s1 = inlined_call_operand.vmem [shape: f32[16,8], index: 1, kind: input, shape index: {}]
  %s2 = inlined_call_operand.vmem [shape: f32[1,8], index: 2, kind: input, shape index: {}]
  %s3 = inlined_call_operand.vmem [shape: f32[16,8], index: 3, kind: input, shape index: {}]
  %s4 = inlined_call_operand.vmem [shape: f32[16,1], index: 4, kind: input, shape index: {}]
  %s5 = inlined_call_operand.vmem [shape: f32[2,16,1024], index: 5, kind: output, shape index: {}]
  %s6 = sld [smem:[#allocation0]]
  $region53: #{se_forward.1} parent=0
    _
  %s8 = ssub.s32 1, %s6
  %s9 = scalar_select 0, %s8, %s6
  loop: start=0, step=1, limit=4
  $region2: #{se_forward.1} parent=0 // loop_pre_header
    _
  $region3: #{se_forward.1} parent=0 // loop_header
    %s11 = sphi 0, %s15
    %p12 = scmp.ge.s32.totalorder %s11, 4
    %s21 = sphi 0, %s23
    %s24 = sphi 0, %s21
    %s25 = sphi 0, %s24
    %s41 = sphi 0, %s25
    %s45 = sphi 0, %s45
    %s47 = sphi 0, %s45
    %s48 = sphi 0, %s47
    %s62 = sphi 0, %s48
    %s66 = sphi 0, %s66
    %s68 = sphi 0, %s66
    %s69 = sphi 0, %s68
    %s83 = sphi 0, %s69
    %s87 = sphi 0, %s87
    %s89 = sphi 0, %s87
    %s90 = sphi 0, %s89
    %s104 = sphi 0, %s90
    %s108 = sphi 0, %s108
    %s110 = sphi 0, %s108
    %s111 = sphi 0, %s110
    %s125 = sphi 0, %s111
    %s131 = sphi 0, %s133
    %s134 = sphi 0, %s131
    %s135 = sphi 0, %s134
    %s151 = sphi 0, %s135
  $region4: #{se_forward.1} parent=0 // loop_header_branch
    %14 = sbr.rel (%p12) target = $region8
  $region5: #{se_forward.1} parent=0 // loop_body
    %s16 = ssub.s32 %s11, 1
    %s17 = ssub.s32 %s11, 2
    %s18 = sadd.s32 %s11, 1
    %s19 = ssub.s32 %s11, %s18
    %p20 = scmp.eq.s32.totalorder %s19, 0
    %s22 = sadd.s32 %s21, 1
    %s23 = scalar_select %p20, %s21, %s22
    %p26 = pneg %p20
    %p27 = scmp.eq.s32.totalorder %s11, 1
    %p28 = por %p26, %p27
    %p29 = scmp.ne.s32.totalorder %s21, %s24
    %p30 = scmp.eq.s32.totalorder %s11, 0
    %p31 = por %p29, %p30
    %p32 = scmp.ne.s32.totalorder %s21, %s24
    %p33 = scmp.eq.s32.totalorder %s16, 1
    %p34 = por %p32, %p33
    %p35 = scmp.ne.s32.totalorder %s24, %s25
    %p36 = scmp.eq.s32.totalorder %s16, 0
    %p37 = por %p35, %p36
    %p38 = scmp.ne.s32.totalorder %s24, %s25
    %p39 = scmp.eq.s32.totalorder %s17, 1
    %p40 = por %p38, %p39
    %p42 = scmp.ne.s32.totalorder %s25, %s41
    %p43 = scmp.eq.s32.totalorder %s17, 0
    %p44 = por %p42, %p43
    %s46 = sadd.s32 %s45, 1
    %p49 = scmp.eq.s32.totalorder %s11, 1
    %p50 = scmp.ne.s32.totalorder %s45, %s47
    %p51 = scmp.eq.s32.totalorder %s11, 0
    %p52 = por %p50, %p51
    %p53 = scmp.ne.s32.totalorder %s45, %s47
    %p54 = scmp.eq.s32.totalorder %s16, 1
    %p55 = por %p53, %p54
    %p56 = scmp.ne.s32.totalorder %s47, %s48
    %p57 = scmp.eq.s32.totalorder %s16, 0
    %p58 = por %p56, %p57
    %p59 = scmp.ne.s32.totalorder %s47, %s48
    %p60 = scmp.eq.s32.totalorder %s17, 1
    %p61 = por %p59, %p60
    %p63 = scmp.ne.s32.totalorder %s48, %s62
    %p64 = scmp.eq.s32.totalorder %s17, 0
    %p65 = por %p63, %p64
    %s67 = sadd.s32 %s66, 1
    %p70 = scmp.eq.s32.totalorder %s11, 1
    %p71 = scmp.ne.s32.totalorder %s66, %s68
    %p72 = scmp.eq.s32.totalorder %s11, 0
    %p73 = por %p71, %p72
    %p74 = scmp.ne.s32.totalorder %s66, %s68
    %p75 = scmp.eq.s32.totalorder %s16, 1
    %p76 = por %p74, %p75
    %p77 = scmp.ne.s32.totalorder %s68, %s69
    %p78 = scmp.eq.s32.totalorder %s16, 0
    %p79 = por %p77, %p78
    %p80 = scmp.ne.s32.totalorder %s68, %s69
    %p81 = scmp.eq.s32.totalorder %s17, 1
    %p82 = por %p80, %p81
    %p84 = scmp.ne.s32.totalorder %s69, %s83
    %p85 = scmp.eq.s32.totalorder %s17, 0
    %p86 = por %p84, %p85
    %s88 = sadd.s32 %s87, 1
    %p91 = scmp.eq.s32.totalorder %s11, 1
    %p92 = scmp.ne.s32.totalorder %s87, %s89
    %p93 = scmp.eq.s32.totalorder %s11, 0
    %p94 = por %p92, %p93
    %p95 = scmp.ne.s32.totalorder %s87, %s89
    %p96 = scmp.eq.s32.totalorder %s16, 1
    %p97 = por %p95, %p96
    %p98 = scmp.ne.s32.totalorder %s89, %s90
    %p99 = scmp.eq.s32.totalorder %s16, 0
    %p100 = por %p98, %p99
    %p101 = scmp.ne.s32.totalorder %s89, %s90
    %p102 = scmp.eq.s32.totalorder %s17, 1
    %p103 = por %p101, %p102
    %p105 = scmp.ne.s32.totalorder %s90, %s104
    %p106 = scmp.eq.s32.totalorder %s17, 0
    %p107 = por %p105, %p106
    %s109 = sadd.s32 %s108, 1
    %p112 = scmp.eq.s32.totalorder %s11, 1
    %p113 = scmp.ne.s32.totalorder %s108, %s110
    %p114 = scmp.eq.s32.totalorder %s11, 0
    %p115 = por %p113, %p114
    %p116 = scmp.ne.s32.totalorder %s108, %s110
    %p117 = scmp.eq.s32.totalorder %s16, 1
    %p118 = por %p116, %p117
    %p119 = scmp.ne.s32.totalorder %s110, %s111
    %p120 = scmp.eq.s32.totalorder %s16, 0
    %p121 = por %p119, %p120
    %p122 = scmp.ne.s32.totalorder %s110, %s111
    %p123 = scmp.eq.s32.totalorder %s17, 1
    %p124 = por %p122, %p123
    %p126 = scmp.ne.s32.totalorder %s111, %s125
    %p127 = scmp.eq.s32.totalorder %s17, 0
    %p128 = por %p126, %p127
    %s129 = ssub.s32 %s11, %s18
    %p130 = scmp.eq.s32.totalorder %s129, 0
    %s132 = sadd.s32 %s131, 1
    %s133 = scalar_select %p130, %s131, %s132
    %p136 = pneg %p130
    %p137 = scmp.eq.s32.totalorder %s11, 1
    %p138 = por %p136, %p137
    %p139 = scmp.ne.s32.totalorder %s131, %s134
    %p140 = scmp.eq.s32.totalorder %s11, 0
    %p141 = por %p139, %p140
    %p142 = scmp.ne.s32.totalorder %s131, %s134
    %p143 = scmp.eq.s32.totalorder %s16, 1
    %p144 = por %p142, %p143
    %p145 = scmp.ne.s32.totalorder %s134, %s135
    %p146 = scmp.eq.s32.totalorder %s16, 0
    %p147 = por %p145, %p146
    %p148 = scmp.ne.s32.totalorder %s134, %s135
    %p149 = scmp.eq.s32.totalorder %s17, 1
    %p150 = por %p148, %p149
    %p152 = scmp.ne.s32.totalorder %s135, %s151
    %p153 = scmp.eq.s32.totalorder %s17, 0
    %p154 = por %p152, %p153
    %p155 = scmp.le.s32.totalorder 1, %s11
    %p156 = scmp.lt.s32.totalorder %s11, 3
    %p157 = pnand %p155, %p156
    %p158 = pneg %p157
    // Predicated region
    $region9: #{se_forward.1} parent=5 // pred_check
      _
    $region10: #{se_forward.1} parent=5 // pred_check_branch
      %160 = sbr.rel (%p157) target = $region12
    $region11: #{se_forward.1} parent=5 // pred_region
      %s161 = ssub.s32 %s11, 1
      // Predicated region
      $region13: #{se_forward.1} parent=11 // pred_check
        %p162 = pneg %p58
      $region14: #{se_forward.1} parent=11 // pred_check_branch
        %164 = sbr.rel (%p162) target = $region16
      $region15: #{se_forward.1} parent=11 // pred_region
        _
      $region16: #{se_forward.1} parent=11 // pred_fallthru
        _
      // Predicated region
      $region17: #{se_forward.1} parent=11 // pred_check
        %p165 = pneg %p79
      $region18: #{se_forward.1} parent=11 // pred_check_branch
        %167 = sbr.rel (%p165) target = $region20
      $region19: #{se_forward.1} parent=11 // pred_region
        _
      $region20: #{se_forward.1} parent=11 // pred_fallthru
        _
      // Predicated region
      $region21: #{se_forward.1} parent=11 // pred_check
        %p168 = pneg %p100
      $region22: #{se_forward.1} parent=11 // pred_check_branch
        %170 = sbr.rel (%p168) target = $region24
      $region23: #{se_forward.1} parent=11 // pred_region
        _
      $region24: #{se_forward.1} parent=11 // pred_fallthru
        _
      // Predicated region
      $region25: #{se_forward.1} parent=11 // pred_check
        %p171 = pneg %p121
      $region26: #{se_forward.1} parent=11 // pred_check_branch
        %173 = sbr.rel (%p171) target = $region28
      $region27: #{se_forward.1} parent=11 // pred_region
        _
      $region28: #{se_forward.1} parent=11 // pred_fallthru
        _
    $region12: #{se_forward.1} parent=5 // pred_fallthru
      _
    %p174 = scmp.lt.s32.totalorder %s11, 2
    // Predicated region
    $region29: #{se_forward.1} parent=5 // pred_check
      %p175 = pneg %p174
    $region30: #{se_forward.1} parent=5 // pred_check_branch
      %177 = sbr.rel (%p175) target = $region32
    $region31: #{se_forward.1} parent=5 // pred_region
      // Predicated region
      $region33: #{se_forward.1} parent=31 // pred_check
        %p178 = pneg %p31
      $region34: #{se_forward.1} parent=31 // pred_check_branch
        %180 = sbr.rel (%p178) target = $region36
      $region35: #{se_forward.1} parent=31 // pred_region
        %p181 = scmp.lt.s32.totalorder %s11, 1
        %s182 = scalar_select %p181, %s11, 1
        %s183 = smul.addr %s182, 16
        %s184 = smul.addr %s183, 8
        %s185 = scalar_lea.vmem %s0, %s184
      $region36: #{se_forward.1} parent=31 // pred_fallthru
        _
    $region32: #{se_forward.1} parent=5 // pred_fallthru
      _
    %p186 = scmp.le.s32.totalorder 1, %s11
    %p187 = scmp.lt.s32.totalorder %s11, 3
    %p188 = pnand %p186, %p187
    %p189 = pneg %p188
    // Predicated region
    $region37: #{se_forward.1} parent=5 // pred_check
      _
    $region38: #{se_forward.1} parent=5 // pred_check_branch
      %191 = sbr.rel (%p188) target = $region40
    $region39: #{se_forward.1} parent=5 // pred_region
      %s192 = ssub.s32 %s11, 1
      %p193 = scmp.lt.s32.totalorder %s16, 1
      %s194 = scalar_select %p193, %s16, 1
      %s195 = smul.addr %s194, 16
      %s196 = smul.addr %s195, 8
      %s197 = scalar_lea.vmem %s0, %s196
      %p198 = pneg %p37
      %p199 = pneg %p34
      %p200 = pneg %p58
      %p201 = pneg %p55
      %p202 = pneg %p79
      %p203 = pneg %p76
      %p204 = pneg %p100
      %p205 = pneg %p97
      %p206 = pneg %p121
      %p207 = pneg %p118
      %p208 = pneg %p147
      %p209 = pneg %p144
      %p210 = scmp.lt.s32.totalorder %s16, 1
      %s211 = scalar_select %p210, %s16, 1
      %s212 = smul.addr %s211, 16
      %s213 = smul.addr %s212, 8
      %s214 = scalar_lea.vmem %s5, %s213
      %p215 = scmp.lt.s32.totalorder %s16, 1
      %s216 = scalar_select %p215, %s16, 1
      %s217 = smul.addr %s216, 16
      %s218 = smul.addr %s217, 8
      %s219 = scalar_lea.vmem %s0, %s218
      %p220 = scmp.lt.s32.totalorder %s16, 1
      %s221 = scalar_select %p220, %s16, 1
      %s222 = smul.addr %s221, 16
      %s223 = smul.addr %s222, 8
      %s224 = scalar_lea.vmem %s5, %s223
      %v225 = vld [vmem:[%s219] sm:$0xff]
      %v226 = vld [vmem:[%s219 + $0x8] sm:$0xff]
      %v227 = vld [vmem:[%s219 + $0x10] sm:$0xff]
      %v228 = vld [vmem:[%s219 + $0x18] sm:$0xff]
      %v229 = vld [vmem:[%s219 + $0x20] sm:$0xff]
      %v230 = vld [vmem:[%s219 + $0x28] sm:$0xff]
      %v231 = vld [vmem:[%s219 + $0x30] sm:$0xff]
      %v232 = vld [vmem:[%s219 + $0x38] sm:$0xff]
      %v233 = vld [vmem:[%s219 + $0x40] sm:$0xff]
      %v234 = vld [vmem:[%s219 + $0x48] sm:$0xff]
      %v235 = vld [vmem:[%s219 + $0x50] sm:$0xff]
      %v236 = vld [vmem:[%s219 + $0x58] sm:$0xff]
      %v237 = vld [vmem:[%s219 + $0x60] sm:$0xff]
      %v238 = vld [vmem:[%s219 + $0x68] sm:$0xff]
      %v239 = vld [vmem:[%s219 + $0x70] sm:$0xff]
      %v240 = vld [vmem:[%s219 + $0x78] sm:$0xff]
      %v241 = vadd.f32 %v225, %v226
      %v242 = vadd.f32 %v241, %v227
      %v243 = vadd.f32 %v242, %v228
      %v244 = vadd.f32 %v243, %v229
      %v245 = vadd.f32 %v244, %v230
      %v246 = vadd.f32 %v245, %v231
      %v247 = vadd.f32 %v246, %v232
      %248 = vadd.xlane.f32.xlu0 %v247
      %v249 = vpop.xlane.xlu0 %248
      %v250 = vadd.f32 %v233, %v234
      %v251 = vadd.f32 %v250, %v235
      %v252 = vadd.f32 %v251, %v236
      %v253 = vadd.f32 %v252, %v237
      %v254 = vadd.f32 %v253, %v238
      %v255 = vadd.f32 %v254, %v239
      %v256 = vadd.f32 %v255, %v240
      %257 = vadd.xlane.f32.xlu0 %v256
      %v258 = vpop.xlane.xlu0 %257
      %v259 = vmul.f32 %v249, 0.0009765625
      %v260 = vmul.f32 %v258, 0.0009765625
      %v261 = vld [vmem:[%s1] sm:$0xff]
      %v262 = vld [vmem:[%s1 + $0x8] sm:$0xff]
      %v263 = vmul.f32 %v259, %v261
      %v264 = vmul.f32 %v260, %v262
      %vm265 = vcmask 64512
      %v266 = vsel %vm265, %v263, 0.0
      %v267 = vsel %vm265, %v264, 0.0
      %v268 = vadd.f32 %v266, %v267
      %v269 = vrot.slane %v268, 4
      %v270 = vadd.f32 %v268, %v269
      %v271 = vrot.slane %v270, 2
      %v272 = vadd.f32 %v270, %v271
      %v273 = vrot.slane %v272, 1
      %v274 = vadd.f32 %v272, %v273
      %v275 = vld [vmem:[%s2] sm:$0x1]
      %v276 = vadd.f32 %v274, %v275
      %v277 = vmax.f32 %v276, 0.0
      %v278 = vld [vmem:[%s3] sm:$0xff]
      %v279 = vld [vmem:[%s3 + $0x8] sm:$0xff]
      %v280 = vlaneseq
      %v281 = vshrl.u32 %v280, 7
      %v282 = vsub.s32 0, %v281
      %v283 = vrot.slane %v277, %v282
      %v284 = vmul.f32 %v283, %v278
      %v285 = vmul.f32 %v283, %v279
      %v286 = vsel %vm265, %v284, 0.0
      %287 = vadd.xlane.f32.xlu0 %v286
      %v288 = vpop.xlane.xlu0 %287
      %v289 = vsel %vm265, %v285, 0.0
      %290 = vadd.xlane.f32.xlu0 %v289
      %v291 = vpop.xlane.xlu0 %290
      %v292 = vld [vmem:[%s4] sm:$0xff]
      %v293 = vld [vmem:[%s4 + $0x8] sm:$0xff]
      %v294 = vadd.f32 %v288, %v292
      %v295 = vadd.f32 %v291, %v293
      %v296 = vxor.u32 %v294, 2147483648
      %v297 = vxor.u32 %v295, 2147483648
      %v298 = vmul.f32 %v296, 1.442695
      %v299 = vpow.pop %v298
      %v300 = vmul.f32 %v297, 1.442695
      %v301 = vpow.pop %v300
      %v302 = vadd.f32 %v299, 1.0
      %v303 = vadd.f32 %v301, 1.0
      %v304 = vrcp.pop %v302
      %v305 = vmul.f32 1.0, %v304
      %v306 = vrcp.pop %v303
      %v307 = vmul.f32 1.0, %v306
      %309 = vset.pattern.permute.xlu0 0
      %310 = vperm.xlu0 %309, %v305
      %v311 = vpop.permute.xlu0 %310
      %314 = vset.pattern.permute.xlu0 0
      %315 = vperm.xlu0 %314, %v307
      %v316 = vpop.permute.xlu0 %315
      %v318 = vmul.f32 %v225, %v311
      %v319 = vmul.f32 %v226, %v311
      %v320 = vmul.f32 %v227, %v311
      %v321 = vmul.f32 %v228, %v311
      %v322 = vmul.f32 %v229, %v311
      %v323 = vmul.f32 %v230, %v311
      %v324 = vmul.f32 %v231, %v311
      %v325 = vmul.f32 %v232, %v311
      %v326 = vmul.f32 %v233, %v316
      %v327 = vmul.f32 %v234, %v316
      %v328 = vmul.f32 %v235, %v316
      %v329 = vmul.f32 %v236, %v316
      %v330 = vmul.f32 %v237, %v316
      %v331 = vmul.f32 %v238, %v316
      %v332 = vmul.f32 %v239, %v316
      %v333 = vmul.f32 %v240, %v316
      %334 = vst [vmem:[%s224] sm:$0xff] %v318
      %335 = vst [vmem:[%s224 + $0x8] sm:$0xff] %v319
      %336 = vst [vmem:[%s224 + $0x10] sm:$0xff] %v320
      %337 = vst [vmem:[%s224 + $0x18] sm:$0xff] %v321
      %338 = vst [vmem:[%s224 + $0x20] sm:$0xff] %v322
      %339 = vst [vmem:[%s224 + $0x28] sm:$0xff] %v323
      %340 = vst [vmem:[%s224 + $0x30] sm:$0xff] %v324
      %341 = vst [vmem:[%s224 + $0x38] sm:$0xff] %v325
      %342 = vst [vmem:[%s224 + $0x40] sm:$0xff] %v326
      %343 = vst [vmem:[%s224 + $0x48] sm:$0xff] %v327
      %344 = vst [vmem:[%s224 + $0x50] sm:$0xff] %v328
      %345 = vst [vmem:[%s224 + $0x58] sm:$0xff] %v329
      %346 = vst [vmem:[%s224 + $0x60] sm:$0xff] %v330
      %347 = vst [vmem:[%s224 + $0x68] sm:$0xff] %v331
      %348 = vst [vmem:[%s224 + $0x70] sm:$0xff] %v332
      %349 = vst [vmem:[%s224 + $0x78] sm:$0xff] %v333
      %p350 = scmp.lt.s32.totalorder %s16, 1
      %s351 = scalar_select %p350, %s16, 1
      %s352 = smul.addr %s351, 16
      %s353 = smul.addr %s352, 8
      %s354 = scalar_lea.vmem %s5, %s353
      // Predicated region
      $region41: #{se_forward.1} parent=39 // pred_check
        %p355 = pneg %p144
      $region42: #{se_forward.1} parent=39 // pred_check_branch
        %357 = sbr.rel (%p355) target = $region44
      $region43: #{se_forward.1} parent=39 // pred_region
        _
      $region44: #{se_forward.1} parent=39 // pred_fallthru
        _
    $region40: #{se_forward.1} parent=5 // pred_fallthru
      _
    %p358 = scmp.le.s32.totalorder 2, %s11
    // Predicated region
    $region45: #{se_forward.1} parent=5 // pred_check
      %p359 = pneg %p358
    $region46: #{se_forward.1} parent=5 // pred_check_branch
      %361 = sbr.rel (%p359) target = $region48
    $region47: #{se_forward.1} parent=5 // pred_region
      %s362 = ssub.s32 %s11, 2
      // Predicated region
      $region49: #{se_forward.1} parent=47 // pred_check
        %p363 = pneg %p150
      $region50: #{se_forward.1} parent=47 // pred_check_branch
        %365 = sbr.rel (%p363) target = $region52
      $region51: #{se_forward.1} parent=47 // pred_region
        %p366 = scmp.lt.s32.totalorder %s17, 1
        %s367 = scalar_select %p366, %s17, 1
        %s368 = smul.addr %s367, 16
        %s369 = smul.addr %s368, 8
        %s370 = scalar_lea.vmem %s5, %s369
      $region52: #{se_forward.1} parent=47 // pred_fallthru
        _
    $region48: #{se_forward.1} parent=5 // pred_fallthru
      _
  $region6: #{se_forward.1} parent=0 // loop_footer
    %s15 = sadd.s32 1, %s11
  $region7: #{se_forward.1} parent=0 // loop_footer_branch
    %10 = sbr.rel target = $region3
  $region8: #{se_forward.1} parent=0 // loop_exit
    _

</llo_original>
